<compile_context>
chip_gen: v6e
topology: v6e:2x2x1
jax: 0.10.0
libtpu: 0.0.40
codegen_flags: <defaults>
</compile_context>

<pallas_src>
import jax
import jax.numpy as jnp
from jax import lax
from jax.experimental import pallas as pl
from jax.experimental.pallas import tpu as pltpu


# ---------------------------------------------------------------------------
# Kernels
# ---------------------------------------------------------------------------

def _lnorm1d_flat_kernel(x_ref, gamma_ref, o_ref):
    """x_ref: (B_t, N) rows (N = L*E, lane-dense); gamma_ref: (1, N)."""
    x = x_ref[...].astype(jnp.float32)                       # (B_t, N)
    n = x.shape[-1]
    inv_n = 1.0 / n
    mean = jnp.sum(x, axis=-1, keepdims=True) * inv_n        # (B_t, 1)
    centered = x - mean                                      # reused for var & output
    var = jnp.sum(centered * centered, axis=-1, keepdims=True) * inv_n
    inv_std = lax.rsqrt(var + 1e-5)                          # (B_t, 1), EUP rsqrt
    # Fold gamma * inv_std into a single scale, then one multiply on the tile.
    scale = gamma_ref[...].astype(jnp.float32) * inv_std     # (B_t, N) via broadcast
    o_ref[...] = (centered * scale).astype(o_ref.dtype)


def _lnorm1d_3d_kernel(x_ref, gamma_ref, o_ref):
    """Fallback (L*E not a multiple of 128): one (1, L, E) batch slab per step."""
    x = x_ref[...].astype(jnp.float32)                       # (1, L, E)
    n = x.shape[1] * x.shape[2]
    mean = jnp.sum(x) / n
    centered = x - mean
    var = jnp.sum(centered * centered) / n
    scale = gamma_ref[...].astype(jnp.float32) * lax.rsqrt(var + 1e-5)   # (1, E)
    o_ref[...] = (centered * scale).astype(o_ref.dtype)


# ---------------------------------------------------------------------------
# Wrapper
# ---------------------------------------------------------------------------

_TARGET_BLOCK_BYTES = 4 << 20   # ~4 MiB per input block (v7x-safe, >85% HBM roofline)


def _choose_batch_tile(B, row_bytes, target_bytes=_TARGET_BLOCK_BYTES):
    """Pick B_t rows per block: legal sublane shape (B_t == B or B_t % 8 == 0),
    fits the byte budget, and (when possible) leaves >= 2 grid steps for
    pipelining / megacore sharding."""
    cands = [bt for bt in range(B, 0, -1) if B % bt == 0 and (bt == B or bt % 8 == 0)]
    fitting = [bt for bt in cands if bt * row_bytes <= target_bytes]
    if fitting:
        multi = [bt for bt in fitting if B // bt >= 2]
        return multi[0] if multi else fitting[0]
    return cands[-1]    # smallest legal tile; vmem_limit is raised to fit it


def _vmem_limit(io_block_bytes, gamma_block_bytes, f32_tile_elems):
    # 2x double-buffered input + 2x double-buffered output + resident gamma
    # + ~4 full-tile f32 temporaries inside the kernel body, with 2x headroom.
    needed = 4 * io_block_bytes + 2 * gamma_block_bytes + 4 * f32_tile_elems * 4
    return int(max(2 * needed, 32 << 20))


def lnorm1d(x, gamma):
    """x: (B, L, E), gamma: (E,). Normalizes over (L, E) per batch element."""
    B, L, E = x.shape
    N = L * E
    elem = jnp.dtype(x.dtype).itemsize
    gelem = jnp.dtype(gamma.dtype).itemsize

    if N % 128 == 0:
        # ---- fast path: lane-dense flattened layout -------------------------
        x2 = x.reshape(B, N)
        # gamma broadcasts over E inside each (L, E) row -> tile across L.
        gamma_flat = jnp.tile(gamma, L).reshape(1, N)
        bt = _choose_batch_tile(B, N * elem)
        vmem_bytes = _vmem_limit(bt * N * elem, N * gelem, bt * N)

        out2 = pl.pallas_call(
            _lnorm1d_flat_kernel,
            out_shape=jax.ShapeDtypeStruct((B, N), x.dtype),
            grid=(B // bt,),
            in_specs=[
                pl.BlockSpec((bt, N), lambda b: (b, 0)),   # B_t rows per step
                pl.BlockSpec((1, N), lambda b: (0, 0)),    # gamma, resident
            ],
            out_specs=pl.BlockSpec((bt, N), lambda b: (b, 0)),
            compiler_params=pltpu.CompilerParams(
                dimension_semantics=("parallel",),
                vmem_limit_bytes=vmem_bytes,
            ),
        )(x2, gamma_flat)
        return out2.reshape(B, L, E)

    # ---- fallback path: full-extent (1, L, E) blocks (masked stores) --------
    gamma2d = gamma.reshape(1, E)
    vmem_bytes = _vmem_limit(N * elem, E * gelem, N)
    return pl.pallas_call(
        _lnorm1d_3d_kernel,
        out_shape=jax.ShapeDtypeStruct((B, L, E), x.dtype),
        grid=(B,),
        in_specs=[
            pl.BlockSpec((1, L, E), lambda b: (b, 0, 0)),
            pl.BlockSpec((1, E), lambda b: (0, 0)),
        ],
        out_specs=pl.BlockSpec((1, L, E), lambda b: (b, 0, 0)),
        compiler_params=pltpu.CompilerParams(
            dimension_semantics=("parallel",),
            vmem_limit_bytes=vmem_bytes,
        ),
    )(x, gamma2d)


# ---------------------------------------------------------------------------
# Reference + demo
# ---------------------------------------------------------------------------

def lnorm1d_ref(x, gamma):
    # Mirrors torch.var_mean(dim=(-1,-2), unbiased=False, keepdim=True)
    mean = jnp.mean(x, axis=(-1, -2), keepdims=True)
    var = jnp.mean((x - mean) ** 2, axis=(-1, -2), keepdims=True)
    std = jnp.sqrt(var + 1e-5)
    return gamma * ((x - mean) / std)


if __name__ == "__main__":
    B, L, E = 2, 8, 32   # batch=2, seq=8, hidden(emb)=32  -> N = 256 (lane-dense path)

    key = jax.random.PRNGKey(0)
    x = jax.random.normal(key, (B, L, E), dtype=jnp.float32)

    # Deterministic parameter init per the module's __init__: gamma = ones(emb)
    gamma = jnp.ones((E,), dtype=jnp.float32)

    out = lnorm1d(x, gamma)
    out = jax.block_until_ready(out)

    ref = lnorm1d_ref(x, gamma)
    assert out.shape == (B, L, E)
    assert jnp.allclose(out, ref, atol=1e-5, rtol=1e-5), "mismatch vs reference"

    print("KERNEL_OK")
</pallas_src>

<mosaic_0001>
module attributes {stable_mosaic.version = 11 : i64} {
  func.func @_lnorm1d_flat_kernel(%arg0: i32, %arg1: memref<2x256xf32, #tpu.memory_space<vmem>>, %arg2: memref<1x256xf32, #tpu.memory_space<vmem>>, %arg3: memref<2x256xf32, #tpu.memory_space<vmem>>) attributes {dimension_semantics = [#tpu.dimension_semantics<parallel>], iteration_bounds = array<i64: 1>, scalar_prefetch = 0 : i64, scratch_operands = 0 : i64, tpu.core_type = #tpu.core_type<tc>, window_params = [{transform_indices = @transform_0, window_bounds = array<i64: 2, 256>}, {pipeline_mode = #tpu.pipeline_mode<synchronous>, transform_indices = @transform_1, window_bounds = array<i64: 1, 256>}, {transform_indices = @transform_2, window_bounds = array<i64: 2, 256>}]} {
    %c0 = arith.constant 0 : index
    %c0_0 = arith.constant 0 : index
    %0 = vector.load %arg1[%c0, %c0_0] : memref<2x256xf32, #tpu.memory_space<vmem>>, vector<2x256xf32>
    %cst = arith.constant dense<0.000000e+00> : vector<2xf32>
    %1 = vector.multi_reduction <add>, %0, %cst [1] : vector<2x256xf32> to vector<2xf32>
    %2 = vector.shape_cast %1 : vector<2xf32> to vector<2x1xf32>
    %cst_1 = arith.constant 3.906250e-03 : f32
    %3 = vector.broadcast %cst_1 : f32 to vector<2x1xf32>
    %4 = arith.mulf %2, %3 : vector<2x1xf32>
    %5 = vector.broadcast %4 : vector<2x1xf32> to vector<2x256xf32>
    %6 = arith.subf %0, %5 : vector<2x256xf32>
    %7 = arith.mulf %6, %6 : vector<2x256xf32>
    %cst_2 = arith.constant dense<0.000000e+00> : vector<2xf32>
    %8 = vector.multi_reduction <add>, %7, %cst_2 [1] : vector<2x256xf32> to vector<2xf32>
    %9 = vector.shape_cast %8 : vector<2xf32> to vector<2x1xf32>
    %cst_3 = arith.constant 3.906250e-03 : f32
    %10 = vector.broadcast %cst_3 : f32 to vector<2x1xf32>
    %11 = arith.mulf %9, %10 : vector<2x1xf32>
    %cst_4 = arith.constant 9.99999974E-6 : f32
    %12 = vector.broadcast %cst_4 : f32 to vector<2x1xf32>
    %13 = arith.addf %11, %12 : vector<2x1xf32>
    %14 = math.rsqrt %13 : vector<2x1xf32>
    %c0_5 = arith.constant 0 : index
    %c0_6 = arith.constant 0 : index
    %15 = vector.load %arg2[%c0_5, %c0_6] : memref<1x256xf32, #tpu.memory_space<vmem>>, vector<1x256xf32>
    %16 = vector.broadcast %15 : vector<1x256xf32> to vector<2x256xf32>
    %17 = vector.broadcast %14 : vector<2x1xf32> to vector<2x256xf32>
    %18 = arith.mulf %16, %17 : vector<2x256xf32>
    %19 = arith.mulf %6, %18 : vector<2x256xf32>
    %c0_7 = arith.constant 0 : index
    %c0_8 = arith.constant 0 : index
    %20 = vector.load %arg3[%c0_7, %c0_8] : memref<2x256xf32, #tpu.memory_space<vmem>>, vector<2x256xf32>
    tpu.vector_store %arg3[%c0_7, %c0_8], %19 {strides = array<i32>} : memref<2x256xf32, #tpu.memory_space<vmem>>, vector<2x256xf32>,
    return
  }
  func.func @transform_0(%arg0: i32) -> (i32, i32) {
    %c0_i32 = arith.constant 0 : i32
    %c0_i32_0 = arith.constant 0 : i32
    return %arg0, %c0_i32 : i32, i32
  }
  func.func @transform_1(%arg0: i32) -> (i32, i32) {
    %c0_i32 = arith.constant 0 : i32
    %c0_i32_0 = arith.constant 0 : i32
    %c0_i32_1 = arith.constant 0 : i32
    return %c0_i32, %c0_i32_0 : i32, i32
  }
  func.func @transform_2(%arg0: i32) -> (i32, i32) {
    %c0_i32 = arith.constant 0 : i32
    %c0_i32_0 = arith.constant 0 : i32
    return %arg0, %c0_i32 : i32, i32
  }
}

</mosaic_0001>

<llo_original>
// kernel: tpu_custom_call.1
$region0: #{tpu_custom_call.1}
  #allocation0 [shape = 'u32[]', space=smem, size = 0x4, offset = 0x4, fixed_abs, tag = 'smem constant byte address 0x4 - core index']
  #allocation1 [shape = 'u32[144,128]{1,0:T(1,128)}', space=vmem, size = 0x12000, scoped, tag = 'internal scratch']
  %s0 = inlined_call_operand.hbm [shape: f32[2,256], index: 0, kind: input, shape index: {}]
  %s1 = inlined_call_operand.hbm [shape: f32[1,256], index: 1, kind: input, shape index: {}]
  %s2 = inlined_call_operand.hbm [shape: f32[2,256], index: 2, kind: output, shape index: {}]
  %s3 = sld [smem:[#allocation0]]
  $region26: #{tpu_custom_call.1} parent=0
    _
  %s5 = ssub.s32 1, %s3
  %s6 = scalar_select 0, %s5, %s3
  $region1: #{tpu_custom_call.1} parent=0
    #allocation2 [shape = 'u8[2048]{0}', space=vmem, size = 0x800, scoped, tag = 'input window, operand 0, single buffered']
    #allocation3 [shape = 's32[1]{0}', space=sflag, size = 0x4, scoped, tag = 'scoped memory for tpu_custom_call.1']
    #allocation4 [shape = 's32[1]{0}', space=sflag, size = 0x4, scoped, tag = 'scoped memory for tpu_custom_call.1']
    #allocation5 [shape = 'u8[1024]{0}', space=vmem, size = 0x400, scoped, tag = 'input window, operand 1, single buffered']
    #allocation6 [shape = 's32[1]{0}', space=sflag, size = 0x4, scoped, tag = 'scoped memory for tpu_custom_call.1']
    #allocation7 [shape = 'u8[2048]{0}', space=vmem, size = 0x800, scoped, tag = 'output window, operand 0, single buffered']
    %7 = vsyncpa [#allocation3], 0
    %8 = vsyncpa [#allocation6], 0
    %9 = vsyncpa [#allocation4], 0
    // Predicated region
    $region2: #{tpu_custom_call.1} parent=1 // pred_check
      _
    $region3: #{tpu_custom_call.1} parent=1 // pred_check_branch
      %11 = sbr.rel (0) target = $region5
    $region4: #{tpu_custom_call.1} parent=1 // pred_region
      %s13 = ssub.s32 64, 64
      %14 = vsyncadd [#allocation3], %s13
      %s16 = sshll.u32 [#allocation2], 4
      %s17 = int_to_ptr.vmem [resolvable:$true] %s16
      %19 = dma.hbm_to_vmem [thread:$0]  %s0, 64, %s17, [#allocation3]
    $region5: #{tpu_custom_call.1} parent=1 // pred_fallthru
      _
    // Predicated region
    $region6: #{tpu_custom_call.1} parent=1 // pred_check
      _
    $region7: #{tpu_custom_call.1} parent=1 // pred_check_branch
      %21 = sbr.rel (0) target = $region9
    $region8: #{tpu_custom_call.1} parent=1 // pred_region
      %s23 = ssub.s32 32, 32
      %24 = vsyncadd [#allocation6], %s23
      %s26 = sshll.u32 [#allocation5], 4
      %s27 = int_to_ptr.vmem [resolvable:$true] %s26
      %29 = dma.hbm_to_vmem [thread:$0]  %s1, 32, %s27, [#allocation6]
    $region9: #{tpu_custom_call.1} parent=1 // pred_fallthru
      _
    // Predicated region
    $region10: #{tpu_custom_call.1} parent=1 // pred_check
      _
    $region11: #{tpu_custom_call.1} parent=1 // pred_check_branch
      %31 = sbr.rel (0) target = $region13
    $region12: #{tpu_custom_call.1} parent=1 // pred_region
      %32 = dma.done [#allocation3], 64
    $region13: #{tpu_custom_call.1} parent=1 // pred_fallthru
      _
    // Predicated region
    $region14: #{tpu_custom_call.1} parent=1 // pred_check
      _
    $region15: #{tpu_custom_call.1} parent=1 // pred_check_branch
      %34 = sbr.rel (0) target = $region17
    $region16: #{tpu_custom_call.1} parent=1 // pred_region
      %35 = dma.done [#allocation6], 32
    $region17: #{tpu_custom_call.1} parent=1 // pred_fallthru
      _
    %v36 = vld [vmem:[#allocation2] sm:$0xf]
    %v39 = vunpack.c.l.s4 1983009808
    %v40 = vunpack.c.0.s8 %v39
    %v41 = vlaneseq
    %v42 = vshrl.u32 %v41, 7
    %v43 = vsub.s32 %v40, %v42
    %v44 = vrot.slane %v36, %v43
    %v45 = vcombine.high %v44, %v44
    %vm48 = vcmask 1041408
    %v49 = vsel %vm48, %v44, 0.0
    %v50 = vsel %vm48, %v45, 0.0
    %v51 = vadd.f32 %v49, %v50
    %52 = vadd.xlane.f32.xlu0 %v51
    %v53 = vpop.xlane.xlu0 %52
    %v54 = vmul.f32 %v53, 0.00390625
    %v57 = vunpack.c.l.s4 269488144
    %v58 = vunpack.c.0.s8 %v57
    %v59 = vlaneseq
    %v60 = vshrl.u32 %v59, 7
    %v61 = vsub.s32 %v58, %v60
    %v62 = vrot.slane %v54, %v61
    %v64 = vsub.f32 %v36, %v62
    %v65 = vmul.f32 %v64, %v64
    %v68 = vunpack.c.l.s4 1983009808
    %v69 = vunpack.c.0.s8 %v68
    %v70 = vlaneseq
    %v71 = vshrl.u32 %v70, 7
    %v72 = vsub.s32 %v69, %v71
    %v73 = vrot.slane %v65, %v72
    %v74 = vcombine.high %v73, %v73
    %v77 = vsel %vm48, %v73, 0.0
    %v78 = vsel %vm48, %v74, 0.0
    %v79 = vadd.f32 %v77, %v78
    %80 = vadd.xlane.f32.xlu0 %v79
    %v81 = vpop.xlane.xlu0 %80
    %v82 = vmul.f32 %v81, 0.00390625
    %v83 = vadd.f32 %v82, 1e-05
    %v84 = vrsqrt.pop %v83
    %v85 = vld [vmem:[#allocation5] sm:$0x3]
    %v87 = vlaneseq
    %v88 = vshrl.u32 %v87, 7
    %v89 = vsub.s32 0, %v88
    %v90 = vrot.slane %v85, %v89
    %v91 = vlaneseq
    %v92 = vshrl.u32 %v91, 7
    %v93 = vsub.s32 1, %v92
    %v94 = vrot.slane %v85, %v93
    %v97 = vmul.f32 %v90, %v84
    %v98 = vmul.f32 %v94, %v84
    %v101 = vcombine.low %v97, %v98
    %v103 = vunpack.c.l.s4 1983009808
    %v104 = vunpack.c.0.s8 %v103
    %v105 = vlaneseq
    %v106 = vshrl.u32 %v105, 7
    %v107 = vsub.s32 %v104, %v106
    %v108 = vrot.slane %v101, %v107
    %v110 = vmul.f32 %v64, %v108
    %111 = vst [vmem:[#allocation7] sm:$0xf] %v110
    // Predicated region
    $region18: #{tpu_custom_call.1} parent=1 // pred_check
      _
    $region19: #{tpu_custom_call.1} parent=1 // pred_check_branch
      %113 = sbr.rel (0) target = $region21
    $region20: #{tpu_custom_call.1} parent=1 // pred_region
      %s115 = ssub.s32 64, 64
      %116 = vsyncadd [#allocation4], %s115
      %s118 = sshll.u32 [#allocation7], 4
      %s119 = int_to_ptr.vmem [resolvable:$true] %s118
      %121 = dma.vmem_to_hbm [thread:$0]  %s119, 64, %s2, [#allocation4]
    $region21: #{tpu_custom_call.1} parent=1 // pred_fallthru
      _
    // Predicated region
    $region22: #{tpu_custom_call.1} parent=1 // pred_check
      _
    $region23: #{tpu_custom_call.1} parent=1 // pred_check_branch
      %123 = sbr.rel (0) target = $region25
    $region24: #{tpu_custom_call.1} parent=1 // pred_region
      %124 = dma.done [#allocation4], 64
    $region25: #{tpu_custom_call.1} parent=1 // pred_fallthru
      _
    %125 = vsyncpa [#allocation3], 1
    %126 = vsyncpa [#allocation6], 1
    %127 = vsyncpa [#allocation4], 1

</llo_original>
